<compile_context>
chip_gen: v7x
topology: tpu7x:2x2x1
jax: 0.10.0
libtpu: 0.0.40
codegen_flags: <defaults>
</compile_context>

<pallas_src>
import functools

import jax
import jax.numpy as jnp
from jax.experimental import pallas as pl
from jax.experimental.pallas import tpu as pltpu


def _stats_kernel(w_ref, p_ref, sum_ref, ssq_ref):
    """Pass 1: conv tile + per-batch, per-channel sum / sum-of-squares."""
    mi = pl.program_id(1)

    @pl.when(mi == 0)
    def _():
        sum_ref[...] = jnp.zeros_like(sum_ref)
        ssq_ref[...] = jnp.zeros_like(ssq_ref)

    # (C_out, K) @ (K, tile_m) -> (C_out, tile_m), f32 accumulation on MXU.
    y = jnp.dot(w_ref[...], p_ref[0], preferred_element_type=jnp.float32)
    # NOTE: E[y^2]-E[y]^2 in f32 is adequate at these scales; a shifted /
    # Welford merge would be safer for very large N*H*W with large means.
    sum_ref[0] += jnp.sum(y, axis=-1, keepdims=True)
    ssq_ref[0] += jnp.sum(y * y, axis=-1, keepdims=True)


def _apply_kernel(w_ref, b_ref, p_ref, o_ref):
    """Pass 2: conv tile with rstd-folded weights, + bias, + ReLU."""
    y = jnp.dot(w_ref[...], p_ref[0], preferred_element_type=jnp.float32)
    y = y + b_ref[...]                     # (C_out, tile_m) + (C_out, 1)
    o_ref[0] = jnp.maximum(y, 0.0).astype(o_ref.dtype)


def _pick_tile_m(m):
    """Largest lane-dense row tile (multiple of 128, <=1024) dividing m."""
    t = (min(m, 1024) // 128) * 128
    while t >= 128:
        if m % t == 0:
            return t
        t -= 128
    return m          # small / odd spatial extents: one full-extent block


@functools.partial(jax.jit, static_argnames=("kernel", "compute_dtype"))
def conv_block_forward(x, weight, kernel=3, compute_dtype=jnp.bfloat16):
    """ConvBlock forward.  x: (N, C_in, H, W);  weight: (C_out, C_in, k, k)."""
    n, c_in, h, w = x.shape
    c_out = weight.shape[0]
    pad = (kernel - 1) // 2
    m_img = h * w                          # output pixels per image
    m_total = n * m_img
    kc = kernel * kernel * c_in            # fused-matmul contraction size

    tile_m = _pick_tile_m(m_img)
    grid = (n, m_img // tile_m)

    # ---- Wrapper-side prep (tiny relative to conv / output traffic) -------
    # Reflect pad (PyTorch padding_mode='reflect') + channel-major im2col:
    #   patches[n, (kh*k + kw)*C_in + c, h*W + w] = xp[n, c, h+kh, w+kw]
    xp = jnp.pad(x, ((0, 0), (0, 0), (pad, pad), (pad, pad)), mode="reflect")
    taps = [xp[:, :, kh:kh + h, kw:kw + w]
            for kh in range(kernel) for kw in range(kernel)]
    patches = jnp.stack(taps, axis=1).reshape(n, kc, m_img)
    patches = patches.astype(compute_dtype)

    # Weight (C_out, C_in, kh, kw) -> (C_out, kc), matching the tap packing.
    w_mat = jnp.transpose(weight, (0, 2, 3, 1)).reshape(c_out, kc)

    p_spec = pl.BlockSpec((1, kc, tile_m), lambda ni, mi: (ni, 0, mi))
    w_spec = pl.BlockSpec((c_out, kc), lambda ni, mi: (0, 0))
    stat_spec = pl.BlockSpec((1, c_out, 1), lambda ni, mi: (ni, 0, 0))

    itemsize = patches.dtype.itemsize
    flops = 2 * m_total * kc * c_out
    p_bytes = m_total * kc * itemsize
    w_bytes = c_out * kc * itemsize
    # VMEM limit derived from actual block sizes (double-buffering + slack),
    # with headroom below v7x's 64 MiB physical VMEM.
    block_bytes = kc * tile_m * itemsize + c_out * kc * itemsize \
        + c_out * tile_m * 4
    vmem_limit = int(min(max(4 * block_bytes + (8 << 20), 16 << 20), 48 << 20))

    # ---- Pass 1: per-(batch, channel) sum / sum-of-squares partials -------
    sums, ssqs = pl.pallas_call(
        _stats_kernel,
        out_shape=(jax.ShapeDtypeStruct((n, c_out, 1), jnp.float32),
                   jax.ShapeDtypeStruct((n, c_out, 1), jnp.float32)),
        grid_spec=pl.GridSpec(
            grid=grid,
            in_specs=[w_spec, p_spec],
            out_specs=(stat_spec, stat_spec),
        ),
        compiler_params=pltpu.CompilerParams(
            dimension_semantics=("parallel", "arbitrary"),
            vmem_limit_bytes=vmem_limit),
        cost_estimate=pl.CostEstimate(
            flops=flops, transcendentals=0,
            bytes_accessed=p_bytes + w_bytes + 2 * n * c_out * 4),
    )(w_mat.astype(compute_dtype), patches)

    # Batch-norm statistics (biased batch variance, PyTorch training mode).
    ch_sum = jnp.sum(sums, axis=0)[:, 0]
    ch_ssq = jnp.sum(ssqs, axis=0)[:, 0]
    mean = ch_sum / m_total
    var = jnp.maximum(ch_ssq / m_total - mean * mean, 0.0)
    rstd = jax.lax.rsqrt(var + 1e-5)

    # Fold BN into the matmul: y_norm = (W * rstd) @ patches + (-mean * rstd).
    w2 = (w_mat * rstd[:, None]).astype(compute_dtype)
    bias = (-mean * rstd)[:, None]                       # (C_out, 1), f32

    # ---- Pass 2: recompute conv tile with folded scale, + bias + ReLU -----
    out_flat = pl.pallas_call(
        _apply_kernel,
        out_shape=jax.ShapeDtypeStruct((n, c_out, m_img), jnp.float32),
        grid_spec=pl.GridSpec(
            grid=grid,
            in_specs=[w_spec,
                      pl.BlockSpec((c_out, 1), lambda ni, mi: (0, 0)),
                      p_spec],
            out_specs=pl.BlockSpec((1, c_out, tile_m),
                                   lambda ni, mi: (ni, 0, mi)),
        ),
        compiler_params=pltpu.CompilerParams(
            dimension_semantics=("parallel", "parallel"),
            vmem_limit_bytes=vmem_limit),
        cost_estimate=pl.CostEstimate(
            flops=flops, transcendentals=0,
            bytes_accessed=p_bytes + w_bytes + c_out * 4 + m_total * c_out * 4),
    )(w2, bias, patches)

    # NCHW via a free contiguous reshape (no slice / transpose in HBM).
    return out_flat.reshape(n, c_out, h, w)


def _reference_forward(x, weight, kernel=3):
    """Pure-JAX reference matching PyTorch ConvBlock semantics (f32)."""
    pad = (kernel - 1) // 2
    xp = jnp.pad(x, ((0, 0), (0, 0), (pad, pad), (pad, pad)), mode="reflect")
    y = jax.lax.conv_general_dilated(
        xp, weight, window_strides=(1, 1), padding="VALID",
        dimension_numbers=("NCHW", "OIHW", "NCHW"))
    mean = jnp.mean(y, axis=(0, 2, 3), keepdims=True)
    var = jnp.mean((y - mean) ** 2, axis=(0, 2, 3), keepdims=True)
    return jnp.maximum((y - mean) * jax.lax.rsqrt(var + 1e-5), 0.0)


if __name__ == "__main__":
    key = jax.random.PRNGKey(0)
    kx, kw_key = jax.random.split(key)

    N, C_IN, C_OUT, H, W, KERNEL = 2, 4, 8, 16, 16, 3

    x = jax.random.normal(kx, (N, C_IN, H, W), dtype=jnp.float32)

    # Kaiming-normal init (fan_in mode, gain sqrt(2)), deterministic.
    fan_in = C_IN * KERNEL * KERNEL
    std = (2.0 / fan_in) ** 0.5
    weight = std * jax.random.normal(kw_key, (C_OUT, C_IN, KERNEL, KERNEL),
                                     dtype=jnp.float32)

    out = conv_block_forward(x, weight, kernel=KERNEL)
    jax.block_until_ready(out)

    ref = _reference_forward(x, weight, kernel=KERNEL)
    assert out.shape == (N, C_OUT, H, W)
    max_err = float(jnp.max(jnp.abs(out - ref)))
    # bf16 matmul operands (f32 accumulation): tolerance loosened accordingly.
    assert jnp.allclose(out, ref, atol=5e-2, rtol=5e-2), f"max_err={max_err}"

    print("KERNEL_OK")
</pallas_src>

<mosaic_0001>
module attributes {stable_mosaic.version = 11 : i64} {
  func.func @_stats_kernel(%arg0: i32, %arg1: i32, %arg2: memref<8x36xbf16, #tpu.memory_space<vmem>>, %arg3: memref<1x36x256xbf16, #tpu.memory_space<vmem>>, %arg4: memref<1x8x1xf32, #tpu.memory_space<vmem>>, %arg5: memref<1x8x1xf32, #tpu.memory_space<vmem>>) attributes {dimension_semantics = [#tpu.dimension_semantics<parallel>, #tpu.dimension_semantics<arbitrary>], iteration_bounds = array<i64: 2, 1>, scalar_prefetch = 0 : i64, scratch_operands = 0 : i64, tpu.core_type = #tpu.core_type<tc>, window_params = [{pipeline_mode = #tpu.pipeline_mode<synchronous>, transform_indices = @transform_0, window_bounds = array<i64: 8, 36>}, {transform_indices = @transform_1, window_bounds = array<i64: 1, 36, 256>}, {transform_indices = @transform_2, window_bounds = array<i64: 1, 8, 1>}, {transform_indices = @transform_3, window_bounds = array<i64: 1, 8, 1>}]} {
    %c0_i32 = arith.constant 0 : i32
    %0 = arith.cmpi eq, %arg1, %c0_i32 : i32
    %1 = arith.extui %0 : i1 to i32
    %c0_i32_0 = arith.constant 0 : i32
    %2 = arith.cmpi ne, %1, %c0_i32_0 : i32
    scf.if %2 {
      %cst_19 = arith.constant 0.000000e+00 : f32
      %24 = vector.broadcast %cst_19 : f32 to vector<1x8x1xf32>
      %c0_20 = arith.constant 0 : index
      %c0_21 = arith.constant 0 : index
      %c0_22 = arith.constant 0 : index
      %25 = vector.load %arg4[%c0_20, %c0_21, %c0_22] : memref<1x8x1xf32, #tpu.memory_space<vmem>>, vector<1x8x1xf32>
      tpu.vector_store %arg4[%c0_20, %c0_21, %c0_22], %24 {strides = array<i32>} : memref<1x8x1xf32, #tpu.memory_space<vmem>>, vector<1x8x1xf32>,
      %cst_23 = arith.constant 0.000000e+00 : f32
      %26 = vector.broadcast %cst_23 : f32 to vector<1x8x1xf32>
      %c0_24 = arith.constant 0 : index
      %c0_25 = arith.constant 0 : index
      %c0_26 = arith.constant 0 : index
      %27 = vector.load %arg5[%c0_24, %c0_25, %c0_26] : memref<1x8x1xf32, #tpu.memory_space<vmem>>, vector<1x8x1xf32>
      tpu.vector_store %arg5[%c0_24, %c0_25, %c0_26], %26 {strides = array<i32>} : memref<1x8x1xf32, #tpu.memory_space<vmem>>, vector<1x8x1xf32>,
    } else {
    }
    %c0 = arith.constant 0 : index
    %c0_1 = arith.constant 0 : index
    %3 = vector.load %arg2[%c0, %c0_1] : memref<8x36xbf16, #tpu.memory_space<vmem>>, vector<8x36xbf16>
    %c0_2 = arith.constant 0 : index
    %c0_3 = arith.constant 0 : index
    %c0_4 = arith.constant 0 : index
    %4 = vector.load %arg3[%c0_2, %c0_3, %c0_4] : memref<1x36x256xbf16, #tpu.memory_space<vmem>>, vector<1x36x256xbf16>
    %5 = vector.shape_cast %4 : vector<1x36x256xbf16> to vector<36x256xbf16>
    %cst = arith.constant dense<0.000000e+00> : vector<8x256xf32>
    %6 = tpu.matmul %3, %5, %cst {dimension_numbers = #tpu.dot_dimension_numbers<[1], [0], [0], [1], [0, 0, 1, 1], [], []>} : vector<8x36xbf16>, vector<36x256xbf16>, vector<8x256xf32> -> vector<8x256xf32>
    %c0_5 = arith.constant 0 : index
    %c0_6 = arith.constant 0 : index
    %c0_7 = arith.constant 0 : index
    %7 = vector.load %arg4[%c0_5, %c0_6, %c0_7] : memref<1x8x1xf32, #tpu.memory_space<vmem>>, vector<1x8x1xf32>
    %8 = vector.shape_cast %7 : vector<1x8x1xf32> to vector<8x1xf32>
    %cst_8 = arith.constant dense<0.000000e+00> : vector<8xf32>
    %9 = vector.multi_reduction <add>, %6, %cst_8 [1] : vector<8x256xf32> to vector<8xf32>
    %10 = vector.shape_cast %9 : vector<8xf32> to vector<8x1xf32>
    %11 = arith.addf %8, %10 : vector<8x1xf32>
    %c0_9 = arith.constant 0 : index
    %c0_10 = arith.constant 0 : index
    %c0_11 = arith.constant 0 : index
    %12 = vector.load %arg4[%c0_9, %c0_10, %c0_11] : memref<1x8x1xf32, #tpu.memory_space<vmem>>, vector<1x8x1xf32>
    %13 = vector.shape_cast %12 : vector<1x8x1xf32> to vector<8x1xf32>
    %14 = vector.shape_cast %11 : vector<8x1xf32> to vector<1x8x1xf32>
    tpu.vector_store %arg4[%c0_9, %c0_10, %c0_11], %14 {strides = array<i32>} : memref<1x8x1xf32, #tpu.memory_space<vmem>>, vector<1x8x1xf32>,
    %c0_12 = arith.constant 0 : index
    %c0_13 = arith.constant 0 : index
    %c0_14 = arith.constant 0 : index
    %15 = vector.load %arg5[%c0_12, %c0_13, %c0_14] : memref<1x8x1xf32, #tpu.memory_space<vmem>>, vector<1x8x1xf32>
    %16 = vector.shape_cast %15 : vector<1x8x1xf32> to vector<8x1xf32>
    %17 = arith.mulf %6, %6 : vector<8x256xf32>
    %cst_15 = arith.constant dense<0.000000e+00> : vector<8xf32>
    %18 = vector.multi_reduction <add>, %17, %cst_15 [1] : vector<8x256xf32> to vector<8xf32>
    %19 = vector.shape_cast %18 : vector<8xf32> to vector<8x1xf32>
    %20 = arith.addf %16, %19 : vector<8x1xf32>
    %c0_16 = arith.constant 0 : index
    %c0_17 = arith.constant 0 : index
    %c0_18 = arith.constant 0 : index
    %21 = vector.load %arg5[%c0_16, %c0_17, %c0_18] : memref<1x8x1xf32, #tpu.memory_space<vmem>>, vector<1x8x1xf32>
    %22 = vector.shape_cast %21 : vector<1x8x1xf32> to vector<8x1xf32>
    %23 = vector.shape_cast %20 : vector<8x1xf32> to vector<1x8x1xf32>
    tpu.vector_store %arg5[%c0_16, %c0_17, %c0_18], %23 {strides = array<i32>} : memref<1x8x1xf32, #tpu.memory_space<vmem>>, vector<1x8x1xf32>,
    return
  }
  func.func @transform_0(%arg0: i32, %arg1: i32) -> (i32, i32) {
    %c0_i32 = arith.constant 0 : i32
    %c0_i32_0 = arith.constant 0 : i32
    %c0_i32_1 = arith.constant 0 : i32
    return %c0_i32, %c0_i32_0 : i32, i32
  }
  func.func @transform_1(%arg0: i32, %arg1: i32) -> (i32, i32, i32) {
    %c0_i32 = arith.constant 0 : i32
    %c0_i32_0 = arith.constant 0 : i32
    return %arg0, %c0_i32, %arg1 : i32, i32, i32
  }
  func.func @transform_2(%arg0: i32, %arg1: i32) -> (i32, i32, i32) {
    %c0_i32 = arith.constant 0 : i32
    %c0_i32_0 = arith.constant 0 : i32
    %c0_i32_1 = arith.constant 0 : i32
    return %arg0, %c0_i32, %c0_i32_0 : i32, i32, i32
  }
  func.func @transform_3(%arg0: i32, %arg1: i32) -> (i32, i32, i32) {
    %c0_i32 = arith.constant 0 : i32
    %c0_i32_0 = arith.constant 0 : i32
    %c0_i32_1 = arith.constant 0 : i32
    return %arg0, %c0_i32, %c0_i32_0 : i32, i32, i32
  }
}

module attributes {stable_mosaic.version = 11 : i64} {
  func.func @_apply_kernel(%arg0: i32, %arg1: i32, %arg2: memref<8x36xbf16, #tpu.memory_space<vmem>>, %arg3: memref<8x1xf32, #tpu.memory_space<vmem>>, %arg4: memref<1x36x256xbf16, #tpu.memory_space<vmem>>, %arg5: memref<1x8x256xf32, #tpu.memory_space<vmem>>) attributes {dimension_semantics = [#tpu.dimension_semantics<parallel>, #tpu.dimension_semantics<parallel>], iteration_bounds = array<i64: 2, 1>, scalar_prefetch = 0 : i64, scratch_operands = 0 : i64, tpu.core_type = #tpu.core_type<tc>, window_params = [{pipeline_mode = #tpu.pipeline_mode<synchronous>, transform_indices = @transform_0, window_bounds = array<i64: 8, 36>}, {pipeline_mode = #tpu.pipeline_mode<synchronous>, transform_indices = @transform_1, window_bounds = array<i64: 8, 1>}, {transform_indices = @transform_2, window_bounds = array<i64: 1, 36, 256>}, {transform_indices = @transform_3, window_bounds = array<i64: 1, 8, 256>}]} {
    %c0 = arith.constant 0 : index
    %c0_0 = arith.constant 0 : index
    %0 = vector.load %arg2[%c0, %c0_0] : memref<8x36xbf16, #tpu.memory_space<vmem>>, vector<8x36xbf16>
    %c0_1 = arith.constant 0 : index
    %c0_2 = arith.constant 0 : index
    %c0_3 = arith.constant 0 : index
    %1 = vector.load %arg4[%c0_1, %c0_2, %c0_3] : memref<1x36x256xbf16, #tpu.memory_space<vmem>>, vector<1x36x256xbf16>
    %2 = vector.shape_cast %1 : vector<1x36x256xbf16> to vector<36x256xbf16>
    %cst = arith.constant dense<0.000000e+00> : vector<8x256xf32>
    %3 = tpu.matmul %0, %2, %cst {dimension_numbers = #tpu.dot_dimension_numbers<[1], [0], [0], [1], [0, 0, 1, 1], [], []>} : vector<8x36xbf16>, vector<36x256xbf16>, vector<8x256xf32> -> vector<8x256xf32>
    %c0_4 = arith.constant 0 : index
    %c0_5 = arith.constant 0 : index
    %4 = vector.load %arg3[%c0_4, %c0_5] : memref<8x1xf32, #tpu.memory_space<vmem>>, vector<8x1xf32>
    %5 = vector.broadcast %4 : vector<8x1xf32> to vector<8x256xf32>
    %6 = arith.addf %3, %5 : vector<8x256xf32>
    %cst_6 = arith.constant 0.000000e+00 : f32
    %7 = vector.broadcast %cst_6 : f32 to vector<8x256xf32>
    %8 = arith.maximumf %6, %7 : vector<8x256xf32>
    %c0_7 = arith.constant 0 : index
    %c0_8 = arith.constant 0 : index
    %c0_9 = arith.constant 0 : index
    %9 = vector.load %arg5[%c0_7, %c0_8, %c0_9] : memref<1x8x256xf32, #tpu.memory_space<vmem>>, vector<1x8x256xf32>
    %10 = vector.shape_cast %9 : vector<1x8x256xf32> to vector<8x256xf32>
    %11 = vector.shape_cast %8 : vector<8x256xf32> to vector<1x8x256xf32>
    tpu.vector_store %arg5[%c0_7, %c0_8, %c0_9], %11 {strides = array<i32>} : memref<1x8x256xf32, #tpu.memory_space<vmem>>, vector<1x8x256xf32>,
    return
  }
  func.func @transform_0(%arg0: i32, %arg1: i32) -> (i32, i32) {
    %c0_i32 = arith.constant 0 : i32
    %c0_i32_0 = arith.constant 0 : i32
    %c0_i32_1 = arith.constant 0 : i32
    return %c0_i32, %c0_i32_0 : i32, i32
  }
  func.func @transform_1(%arg0: i32, %arg1: i32) -> (i32, i32) {
    %c0_i32 = arith.constant 0 : i32
    %c0_i32_0 = arith.constant 0 : i32
    %c0_i32_1 = arith.constant 0 : i32
    return %c0_i32, %c0_i32_0 : i32, i32
  }
  func.func @transform_2(%arg0: i32, %arg1: i32) -> (i32, i32, i32) {
    %c0_i32 = arith.constant 0 : i32
    %c0_i32_0 = arith.constant 0 : i32
    return %arg0, %c0_i32, %arg1 : i32, i32, i32
  }
  func.func @transform_3(%arg0: i32, %arg1: i32) -> (i32, i32, i32) {
    %c0_i32 = arith.constant 0 : i32
    %c0_i32_0 = arith.constant 0 : i32
    return %arg0, %c0_i32, %arg1 : i32, i32, i32
  }
}

</mosaic_0001>

<llo_original>
// kernel: conv_block_forward.2
$region0: #{conv_block_forward.2}
  #allocation0 [shape = 'u32[]', space=smem, size = 0x4, offset = 0x4, fixed_abs, tag = 'smem constant byte address 0x4 - core index']
  #allocation1 [shape = 'u32[144,128]{1,0:T(1,128)}', space=vmem, size = 0x12000, scoped, tag = 'internal scratch']
  %s0 = inlined_call_operand.vmem [shape: bf16[8,36], index: 0, kind: input, shape index: {}]
  %s1 = inlined_call_operand.vmem [shape: bf16[2,36,256], index: 1, kind: input, shape index: {}]
  %s2 = inlined_call_operand.vmem [shape: f32[2,8,1], index: 2, kind: output, shape index: {0}]
  %s3 = inlined_call_operand.vmem [shape: f32[2,8,1], index: 3, kind: output, shape index: {1}]
  %4 = xla_tuple %s2, %s3
  %s5 = sld [smem:[#allocation0]]
  $region53: #{conv_block_forward.2} parent=0
    _
  %s7 = ssub.s32 1, %s5
  %s8 = scalar_select 0, %s7, %s5
  loop: start=0, step=1, limit=4
  $region2: #{conv_block_forward.2} parent=0 // loop_pre_header
    _
  $region3: #{conv_block_forward.2} parent=0 // loop_header
    %s10 = sphi 0, %s14
    %p11 = scmp.ge.s32.totalorder %s10, 4
    %s17 = sphi 0, %s29
    %s18 = sphi 0, %s25
    %s19 = sphi 0, %s17
    %s20 = sphi 0, %s18
    %s21 = sphi 0, %s19
    %s22 = sphi 0, %s20
    %s30 = sphi 0, %s30
    %s32 = sphi 0, %s30
    %s33 = sphi 0, %s32
    %s47 = sphi 0, %s33
    %s55 = sphi 0, %s57
    %s58 = sphi 0, %s55
    %s59 = sphi 0, %s58
    %s75 = sphi 0, %s59
    %s81 = sphi 0, %s83
    %s84 = sphi 0, %s81
    %s85 = sphi 0, %s84
    %s101 = sphi 0, %s85
    %s107 = sphi 0, %s109
    %s110 = sphi 0, %s107
    %s111 = sphi 0, %s110
    %s127 = sphi 0, %s111
  $region4: #{conv_block_forward.2} parent=0 // loop_header_branch
    %13 = sbr.rel (%p11) target = $region8
  $region5: #{conv_block_forward.2} parent=0 // loop_body
    %s15 = ssub.s32 %s10, 1
    %s16 = ssub.s32 %s10, 2
    %s23 = sadd.s32 1, %s18
    %p24 = scmp.ge.s32.totalorder %s23, 1
    %s25 = scalar_select %p24, 0, %s23
    %s26 = sadd.s32 1, %s17
    %s27 = scalar_select %p24, %s26, %s17
    %p28 = scmp.ge.s32.totalorder %s27, 2
    %s29 = scalar_select %p28, 0, %s27
    %s31 = sadd.s32 %s30, 1
    %p34 = scmp.eq.s32.totalorder %s10, 1
    %p35 = scmp.ne.s32.totalorder %s30, %s32
    %p36 = scmp.eq.s32.totalorder %s10, 0
    %p37 = por %p35, %p36
    %p38 = scmp.ne.s32.totalorder %s30, %s32
    %p39 = scmp.eq.s32.totalorder %s15, 1
    %p40 = por %p38, %p39
    %p41 = scmp.ne.s32.totalorder %s32, %s33
    %p42 = scmp.eq.s32.totalorder %s15, 0
    %p43 = por %p41, %p42
    %p44 = scmp.ne.s32.totalorder %s32, %s33
    %p45 = scmp.eq.s32.totalorder %s16, 1
    %p46 = por %p44, %p45
    %p48 = scmp.ne.s32.totalorder %s33, %s47
    %p49 = scmp.eq.s32.totalorder %s16, 0
    %p50 = por %p48, %p49
    %s51 = ssub.s32 %s17, %s29
    %s52 = ssub.s32 %s18, %s25
    %s53 = sor.u32 %s51, %s52
    %p54 = scmp.eq.s32.totalorder %s53, 0
    %s56 = sadd.s32 %s55, 1
    %s57 = scalar_select %p54, %s55, %s56
    %p60 = pneg %p54
    %p61 = scmp.eq.s32.totalorder %s10, 1
    %p62 = por %p60, %p61
    %p63 = scmp.ne.s32.totalorder %s55, %s58
    %p64 = scmp.eq.s32.totalorder %s10, 0
    %p65 = por %p63, %p64
    %p66 = scmp.ne.s32.totalorder %s55, %s58
    %p67 = scmp.eq.s32.totalorder %s15, 1
    %p68 = por %p66, %p67
    %p69 = scmp.ne.s32.totalorder %s58, %s59
    %p70 = scmp.eq.s32.totalorder %s15, 0
    %p71 = por %p69, %p70
    %p72 = scmp.ne.s32.totalorder %s58, %s59
    %p73 = scmp.eq.s32.totalorder %s16, 1
    %p74 = por %p72, %p73
    %p76 = scmp.ne.s32.totalorder %s59, %s75
    %p77 = scmp.eq.s32.totalorder %s16, 0
    %p78 = por %p76, %p77
    %s79 = ssub.s32 %s17, %s29
    %p80 = scmp.eq.s32.totalorder %s79, 0
    %s82 = sadd.s32 %s81, 1
    %s83 = scalar_select %p80, %s81, %s82
    %p86 = pneg %p80
    %p87 = scmp.eq.s32.totalorder %s10, 1
    %p88 = por %p86, %p87
    %p89 = scmp.ne.s32.totalorder %s81, %s84
    %p90 = scmp.eq.s32.totalorder %s10, 0
    %p91 = por %p89, %p90
    %p92 = scmp.ne.s32.totalorder %s81, %s84
    %p93 = scmp.eq.s32.totalorder %s15, 1
    %p94 = por %p92, %p93
    %p95 = scmp.ne.s32.totalorder %s84, %s85
    %p96 = scmp.eq.s32.totalorder %s15, 0
    %p97 = por %p95, %p96
    %p98 = scmp.ne.s32.totalorder %s84, %s85
    %p99 = scmp.eq.s32.totalorder %s16, 1
    %p100 = por %p98, %p99
    %p102 = scmp.ne.s32.totalorder %s85, %s101
    %p103 = scmp.eq.s32.totalorder %s16, 0
    %p104 = por %p102, %p103
    %s105 = ssub.s32 %s17, %s29
    %p106 = scmp.eq.s32.totalorder %s105, 0
    %s108 = sadd.s32 %s107, 1
    %s109 = scalar_select %p106, %s107, %s108
    %p112 = pneg %p106
    %p113 = scmp.eq.s32.totalorder %s10, 1
    %p114 = por %p112, %p113
    %p115 = scmp.ne.s32.totalorder %s107, %s110
    %p116 = scmp.eq.s32.totalorder %s10, 0
    %p117 = por %p115, %p116
    %p118 = scmp.ne.s32.totalorder %s107, %s110
    %p119 = scmp.eq.s32.totalorder %s15, 1
    %p120 = por %p118, %p119
    %p121 = scmp.ne.s32.totalorder %s110, %s111
    %p122 = scmp.eq.s32.totalorder %s15, 0
    %p123 = por %p121, %p122
    %p124 = scmp.ne.s32.totalorder %s110, %s111
    %p125 = scmp.eq.s32.totalorder %s16, 1
    %p126 = por %p124, %p125
    %p128 = scmp.ne.s32.totalorder %s111, %s127
    %p129 = scmp.eq.s32.totalorder %s16, 0
    %p130 = por %p128, %p129
    %p131 = scmp.le.s32.totalorder 1, %s10
    %p132 = scmp.lt.s32.totalorder %s10, 3
    %p133 = pnand %p131, %p132
    %p134 = pneg %p133
    // Predicated region
    $region9: #{conv_block_forward.2} parent=5 // pred_check
      _
    $region10: #{conv_block_forward.2} parent=5 // pred_check_branch
      %136 = sbr.rel (%p133) target = $region12
    $region11: #{conv_block_forward.2} parent=5 // pred_region
      %s137 = ssub.s32 %s10, 1
      // Predicated region
      $region13: #{conv_block_forward.2} parent=11 // pred_check
        %p138 = pneg %p43
      $region14: #{conv_block_forward.2} parent=11 // pred_check_branch
        %140 = sbr.rel (%p138) target = $region16
      $region15: #{conv_block_forward.2} parent=11 // pred_region
        _
      $region16: #{conv_block_forward.2} parent=11 // pred_fallthru
        _
    $region12: #{conv_block_forward.2} parent=5 // pred_fallthru
      _
    %p141 = scmp.lt.s32.totalorder %s10, 2
    // Predicated region
    $region17: #{conv_block_forward.2} parent=5 // pred_check
      %p142 = pneg %p141
    $region18: #{conv_block_forward.2} parent=5 // pred_check_branch
      %144 = sbr.rel (%p142) target = $region20
    $region19: #{conv_block_forward.2} parent=5 // pred_region
      // Predicated region
      $region21: #{conv_block_forward.2} parent=19 // pred_check
        %p145 = pneg %p65
      $region22: #{conv_block_forward.2} parent=19 // pred_check_branch
        %147 = sbr.rel (%p145) target = $region24
      $region23: #{conv_block_forward.2} parent=19 // pred_region
        %s148 = smul.u32 2, %s18
        %p149 = scmp.lt.s32.totalorder %s17, 1
        %s150 = scalar_select %p149, %s17, 1
        %p151 = scmp.lt.s32.totalorder %s148, 1
        %s152 = scalar_select %p151, %s148, 1
        %s153 = smul.addr %s150, 10
        %s154 = sadd.s32 %s152, %s153
        %s155 = smul.addr %s154, 4
        %s156 = scalar_lea.vmem %s1, %s155
        %s157 = smul.u32 2, %s18
      $region24: #{conv_block_forward.2} parent=19 // pred_fallthru
        _
    $region20: #{conv_block_forward.2} parent=5 // pred_fallthru
      _
    %p158 = scmp.le.s32.totalorder 1, %s10
    %p159 = scmp.lt.s32.totalorder %s10, 3
    %p160 = pnand %p158, %p159
    %p161 = pneg %p160
    // Predicated region
    $region25: #{conv_block_forward.2} parent=5 // pred_check
      _
    $region26: #{conv_block_forward.2} parent=5 // pred_check_branch
      %163 = sbr.rel (%p160) target = $region28
    $region27: #{conv_block_forward.2} parent=5 // pred_region
      %s164 = ssub.s32 %s10, 1
      %p165 = pneg %p43
      %p166 = pneg %p40
      %s167 = smul.u32 2, %s20
      %p168 = scmp.lt.s32.totalorder %s19, 1
      %s169 = scalar_select %p168, %s19, 1
      %p170 = scmp.lt.s32.totalorder %s167, 1
      %s171 = scalar_select %p170, %s167, 1
      %s172 = smul.addr %s169, 10
      %s173 = sadd.s32 %s171, %s172
      %s174 = smul.addr %s173, 4
      %s175 = scalar_lea.vmem %s1, %s174
      %p176 = pneg %p71
      %p177 = pneg %p68
      %p178 = pneg %p97
      %p179 = pneg %p94
      %p180 = scmp.lt.s32.totalorder %s19, 1
      %s181 = scalar_select %p180, %s19, 1
      %s182 = smul.addr %s181, 8
      %s183 = scalar_lea.vmem %s2, %s182
      %p184 = pneg %p123
      %p185 = pneg %p120
      %p186 = scmp.lt.s32.totalorder %s19, 1
      %s187 = scalar_select %p186, %s19, 1
      %s188 = smul.addr %s187, 8
      %s189 = scalar_lea.vmem %s3, %s188
      %s190 = smul.u32 2, %s20
      %p191 = scmp.lt.s32.totalorder %s19, 1
      %s192 = scalar_select %p191, %s19, 1
      %p193 = scmp.lt.s32.totalorder %s190, 1
      %s194 = scalar_select %p193, %s190, 1
      %s195 = smul.addr %s192, 10
      %s196 = sadd.s32 %s194, %s195
      %s197 = smul.addr %s196, 4
      %s198 = scalar_lea.vmem %s1, %s197
      %s199 = smul.u32 2, %s20
      %p200 = scmp.lt.s32.totalorder %s19, 1
      %s201 = scalar_select %p200, %s19, 1
      %s202 = smul.addr %s201, 8
      %s203 = scalar_lea.vmem %s2, %s202
      %p204 = scmp.lt.s32.totalorder %s19, 1
      %s205 = scalar_select %p204, %s19, 1
      %s206 = smul.addr %s205, 8
      %s207 = scalar_lea.vmem %s3, %s206
      %p209 = scmp.eq.s32.totalorder %s20, 0
      // Predicated region
      $region29: #{conv_block_forward.2} parent=27 // pred_check
        %p210 = pneg %p209
      $region30: #{conv_block_forward.2} parent=27 // pred_check_branch
        %212 = sbr.rel (%p210) target = $region32
      $region31: #{conv_block_forward.2} parent=27 // pred_region
        %vm213 = vcmask 7168
        %214 = vst.msk [vmem:[%s203] sm:$0xff] %vm213, 0.0
        %215 = vst.msk [vmem:[%s207] sm:$0xff] %vm213, 0.0
      $region32: #{conv_block_forward.2} parent=27 // pred_fallthru
        _
      %v216 = vld [vmem:[%s0] sm:$0xf]
      %v217 = vld [vmem:[%s198] sm:$0xff]
      %v218 = vld [vmem:[%s198 + $0x8] sm:$0xff]
      %v219 = vld [vmem:[%s198 + $0x10] sm:$0xff]
      %v220 = vld [vmem:[%s198 + $0x18] sm:$0xff]
      %v221 = vld [vmem:[%s198 + $0x20] sm:$0x33]
      %v227 = vunpack.c.l.b16 %v217
      %v228 = vunpack.c.h.b16 %v217
      %v229 = vunpack.c.l.b16 %v218
      %v230 = vunpack.c.h.b16 %v218
      %v231 = vunpack.c.l.b16 %v219
      %v232 = vunpack.c.h.b16 %v219
      %v233 = vunpack.c.l.b16 %v220
      %v234 = vunpack.c.h.b16 %v220
      %v235 = vunpack.c.l.b16 %v221
      %v236 = vunpack.c.h.b16 %v221
      %v237 = vpack.c.b16 %v229, %v227
      %v238 = vpack.c.b16 %v230, %v228
      %v239 = vpack.c.b16 %v233, %v231
      %v240 = vpack.c.b16 %v234, %v232
      %v241 = vpack.c.b16 %v235, %v235
      %v242 = vpack.c.b16 %v236, %v236
      %vm247 = vcmask 293888
      %v249 = vsel %vm247, %v216, 0
      %vm251 = vcmask 1041408
      %v253 = vsel %vm251, %v241, 0
      %v256 = vsel %vm251, %v242, 0
      %258 = vmatprep.subr.bf16.mxu0 %v238
      %259 = vmatpush1.bf16.msra.mxu0 %v237
      %260 = vmatprep.subr.bf16.mxu0 %v240
      %261 = vmatpush1.bf16.msra.mxu0 %v239
      %262 = vmatprep.subr.bf16.mxu0 %v256
      %263 = vmatpush1.bf16.msra.mxu0 %v253
      %264 = vmatprep.subr.bf16.mxu0 0
      %265 = vmatpush1.bf16.msra.mxu0 0
      %266 = vmatprep.subr.bf16.mxu0 0
      %267 = vmatpush1.bf16.msra.mxu0 0
      %268 = vmatprep.subr.bf16.mxu0 0
      %269 = vmatpush1.bf16.msra.mxu0 0
      %270 = vmatprep.subr.bf16.mxu0 0
      %271 = vmatpush1.bf16.msra.mxu0 0
      %272 = vmatprep.subr.bf16.mxu0 0
      %273 = vmatpush1.bf16.msra.mxu0 0
      %274 = vmatprep.subr.bf16.mxu0 0
      %275 = vmatpush1.bf16.msra.mxu0 0
      %276 = vmatprep.subr.bf16.mxu0 0
      %277 = vmatpush1.bf16.msra.mxu0 0
      %278 = vmatprep.subr.bf16.mxu0 0
      %279 = vmatpush1.bf16.msra.mxu0 0
      %280 = vmatprep.subr.bf16.mxu0 0
      %281 = vmatpush1.bf16.msra.mxu0 0
      %282 = vmatprep.subr.bf16.mxu0 0
      %283 = vmatpush1.bf16.msra.mxu0 0
      %284 = vmatprep.subr.bf16.mxu0 0
      %285 = vmatpush1.bf16.msra.mxu0 0
      %286 = vmatprep.subr.bf16.mxu0 0
      %287 = vmatpush1.bf16.msra.mxu0 0
      %288 = vmatprep.subr.bf16.mxu0 0
      %289 = vmatpush1.bf16.msra.mxu0 0
      %290 = vmatprep.mubr.bf16.mxu0 0
      %291 = vmatmul.mubr.bf16.gmra.mrb[0].mxu0 %v249
      %v292 = vpop.f32.mrb[0].mxu0
      %v293 = vadd.f32 0.0, %v292
      %v294 = vpop.f32.mrb[0].mxu0
      %v295 = vadd.f32 0.0, %v294
      %v296 = vpop.f32.mrb[0].mxu0
      %v297 = vpop.f32.mrb[0].mxu0
      %298 = vdwg.mxu0
      %v299 = vld [vmem:[%s203] sm:$0xff]
      %v300 = vadd.f32 %v293, %v295
      %301 = vadd.xlane.f32.xlu0 %v300
      %v302 = vpop.xlane.xlu0 %301
      %v303 = vadd.f32 %v299, %v302
      %vm304 = vcmask 7168
      %305 = vst.msk [vmem:[%s203] sm:$0xff] %vm304, %v303
      %v306 = vld [vmem:[%s207] sm:$0xff]
      %v307 = vmul.f32 %v293, %v293
      %v308 = vmul.f32 %v295, %v295
      %v309 = vadd.f32 %v307, %v308
      %310 = vadd.xlane.f32.xlu0 %v309
      %v311 = vpop.xlane.xlu0 %310
      %v312 = vadd.f32 %v306, %v311
      %313 = vst.msk [vmem:[%s207] sm:$0xff] %vm304, %v312
      %p314 = scmp.lt.s32.totalorder %s19, 1
      %s315 = scalar_select %p314, %s19, 1
      %s316 = smul.addr %s315, 8
      %s317 = scalar_lea.vmem %s2, %s316
      %p318 = scmp.lt.s32.totalorder %s19, 1
      %s319 = scalar_select %p318, %s19, 1
      %s320 = smul.addr %s319, 8
      %s321 = scalar_lea.vmem %s3, %s320
      // Predicated region
      $region33: #{conv_block_forward.2} parent=27 // pred_check
        %p322 = pneg %p94
      $region34: #{conv_block_forward.2} parent=27 // pred_check_branch
        %324 = sbr.rel (%p322) target = $region36
      $region35: #{conv_block_forward.2} parent=27 // pred_region
        _
      $region36: #{conv_block_forward.2} parent=27 // pred_fallthru
        _
      // Predicated region
      $region37: #{conv_block_forward.2} parent=27 // pred_check
        %p325 = pneg %p120
      $region38: #{conv_block_forward.2} parent=27 // pred_check_branch
        %327 = sbr.rel (%p325) target = $region40
      $region39: #{conv_block_forward.2} parent=27 // pred_region
        _
      $region40: #{conv_block_forward.2} parent=27 // pred_fallthru
        _
    $region28: #{conv_block_forward.2} parent=5 // pred_fallthru
      _
    %p328 = scmp.le.s32.totalorder 2, %s10
    // Predicated region
    $region41: #{conv_block_forward.2} parent=5 // pred_check
      %p329 = pneg %p328
    $region42: #{conv_block_forward.2} parent=5 // pred_check_branch
      %331 = sbr.rel (%p329) target = $region44
    $region43: #{conv_block_forward.2} parent=5 // pred_region
      %s332 = ssub.s32 %s10, 2
      // Predicated region
      $region45: #{conv_block_forward.2} parent=43 // pred_check
        %p333 = pneg %p100
      $region46: #{conv_block_forward.2} parent=43 // pred_check_branch
        %335 = sbr.rel (%p333) target = $region48
      $region47: #{conv_block_forward.2} parent=43 // pred_region
        %p336 = scmp.lt.s32.totalorder %s21, 1
        %s337 = scalar_select %p336, %s21, 1
        %s338 = smul.addr %s337, 8
        %s339 = scalar_lea.vmem %s2, %s338
      $region48: #{conv_block_forward.2} parent=43 // pred_fallthru
        _
      // Predicated region
      $region49: #{conv_block_forward.2} parent=43 // pred_check
        %p340 = pneg %p126
      $region50: #{conv_block_forward.2} parent=43 // pred_check_branch
        %342 = sbr.rel (%p340) target = $region52
      $region51: #{conv_block_forward.2} parent=43 // pred_region
        %p343 = scmp.lt.s32.totalorder %s21, 1
        %s344 = scalar_select %p343, %s21, 1
        %s345 = smul.addr %s344, 8
        %s346 = scalar_lea.vmem %s3, %s345
      $region52: #{conv_block_forward.2} parent=43 // pred_fallthru
        _
    $region44: #{conv_block_forward.2} parent=5 // pred_fallthru
      _
  $region6: #{conv_block_forward.2} parent=0 // loop_footer
    %s14 = sadd.s32 1, %s10
  $region7: #{conv_block_forward.2} parent=0 // loop_footer_branch
    %9 = sbr.rel target = $region3
  $region8: #{conv_block_forward.2} parent=0 // loop_exit
    _

// kernel: conv_block_forward.3
$region0: #{conv_block_forward.3}
  #allocation0 [shape = 'u32[]', space=smem, size = 0x4, offset = 0x4, fixed_abs, tag = 'smem constant byte address 0x4 - core index']
  #allocation1 [shape = 'u32[144,128]{1,0:T(1,128)}', space=vmem, size = 0x12000, scoped, tag = 'internal scratch']
  %s0 = inlined_call_operand.vmem [shape: bf16[8,36], index: 0, kind: input, shape index: {}]
  %s1 = inlined_call_operand.vmem [shape: f32[8,1], index: 1, kind: input, shape index: {}]
  %s2 = inlined_call_operand.vmem [shape: bf16[2,36,256], index: 2, kind: input, shape index: {}]
  %s3 = inlined_call_operand.vmem [shape: f32[2,8,256], index: 3, kind: output, shape index: {}]
  %s4 = sld [smem:[#allocation0]]
  $region45: #{conv_block_forward.3} parent=0
    _
  %s6 = ssub.s32 1, %s4
  %s7 = scalar_select 0, %s6, %s4
  loop: start=0, step=1, limit=4
  $region2: #{conv_block_forward.3} parent=0 // loop_pre_header
    _
  $region3: #{conv_block_forward.3} parent=0 // loop_header
    %s9 = sphi 0, %s13
    %p10 = scmp.ge.s32.totalorder %s9, 4
    %s16 = sphi 0, %s28
    %s17 = sphi 0, %s24
    %s18 = sphi 0, %s16
    %s19 = sphi 0, %s17
    %s20 = sphi 0, %s18
    %s21 = sphi 0, %s19
    %s29 = sphi 0, %s29
    %s31 = sphi 0, %s29
    %s32 = sphi 0, %s31
    %s46 = sphi 0, %s32
    %s50 = sphi 0, %s50
    %s52 = sphi 0, %s50
    %s53 = sphi 0, %s52
    %s67 = sphi 0, %s53
    %s75 = sphi 0, %s77
    %s78 = sphi 0, %s75
    %s79 = sphi 0, %s78
    %s95 = sphi 0, %s79
    %s103 = sphi 0, %s105
    %s106 = sphi 0, %s103
    %s107 = sphi 0, %s106
    %s123 = sphi 0, %s107
  $region4: #{conv_block_forward.3} parent=0 // loop_header_branch
    %12 = sbr.rel (%p10) target = $region8
  $region5: #{conv_block_forward.3} parent=0 // loop_body
    %s14 = ssub.s32 %s9, 1
    %s15 = ssub.s32 %s9, 2
    %s22 = sadd.s32 1, %s17
    %p23 = scmp.ge.s32.totalorder %s22, 1
    %s24 = scalar_select %p23, 0, %s22
    %s25 = sadd.s32 1, %s16
    %s26 = scalar_select %p23, %s25, %s16
    %p27 = scmp.ge.s32.totalorder %s26, 2
    %s28 = scalar_select %p27, 0, %s26
    %s30 = sadd.s32 %s29, 1
    %p33 = scmp.eq.s32.totalorder %s9, 1
    %p34 = scmp.ne.s32.totalorder %s29, %s31
    %p35 = scmp.eq.s32.totalorder %s9, 0
    %p36 = por %p34, %p35
    %p37 = scmp.ne.s32.totalorder %s29, %s31
    %p38 = scmp.eq.s32.totalorder %s14, 1
    %p39 = por %p37, %p38
    %p40 = scmp.ne.s32.totalorder %s31, %s32
    %p41 = scmp.eq.s32.totalorder %s14, 0
    %p42 = por %p40, %p41
    %p43 = scmp.ne.s32.totalorder %s31, %s32
    %p44 = scmp.eq.s32.totalorder %s15, 1
    %p45 = por %p43, %p44
    %p47 = scmp.ne.s32.totalorder %s32, %s46
    %p48 = scmp.eq.s32.totalorder %s15, 0
    %p49 = por %p47, %p48
    %s51 = sadd.s32 %s50, 1
    %p54 = scmp.eq.s32.totalorder %s9, 1
    %p55 = scmp.ne.s32.totalorder %s50, %s52
    %p56 = scmp.eq.s32.totalorder %s9, 0
    %p57 = por %p55, %p56
    %p58 = scmp.ne.s32.totalorder %s50, %s52
    %p59 = scmp.eq.s32.totalorder %s14, 1
    %p60 = por %p58, %p59
    %p61 = scmp.ne.s32.totalorder %s52, %s53
    %p62 = scmp.eq.s32.totalorder %s14, 0
    %p63 = por %p61, %p62
    %p64 = scmp.ne.s32.totalorder %s52, %s53
    %p65 = scmp.eq.s32.totalorder %s15, 1
    %p66 = por %p64, %p65
    %p68 = scmp.ne.s32.totalorder %s53, %s67
    %p69 = scmp.eq.s32.totalorder %s15, 0
    %p70 = por %p68, %p69
    %s71 = ssub.s32 %s16, %s28
    %s72 = ssub.s32 %s17, %s24
    %s73 = sor.u32 %s71, %s72
    %p74 = scmp.eq.s32.totalorder %s73, 0
    %s76 = sadd.s32 %s75, 1
    %s77 = scalar_select %p74, %s75, %s76
    %p80 = pneg %p74
    %p81 = scmp.eq.s32.totalorder %s9, 1
    %p82 = por %p80, %p81
    %p83 = scmp.ne.s32.totalorder %s75, %s78
    %p84 = scmp.eq.s32.totalorder %s9, 0
    %p85 = por %p83, %p84
    %p86 = scmp.ne.s32.totalorder %s75, %s78
    %p87 = scmp.eq.s32.totalorder %s14, 1
    %p88 = por %p86, %p87
    %p89 = scmp.ne.s32.totalorder %s78, %s79
    %p90 = scmp.eq.s32.totalorder %s14, 0
    %p91 = por %p89, %p90
    %p92 = scmp.ne.s32.totalorder %s78, %s79
    %p93 = scmp.eq.s32.totalorder %s15, 1
    %p94 = por %p92, %p93
    %p96 = scmp.ne.s32.totalorder %s79, %s95
    %p97 = scmp.eq.s32.totalorder %s15, 0
    %p98 = por %p96, %p97
    %s99 = ssub.s32 %s16, %s28
    %s100 = ssub.s32 %s17, %s24
    %s101 = sor.u32 %s99, %s100
    %p102 = scmp.eq.s32.totalorder %s101, 0
    %s104 = sadd.s32 %s103, 1
    %s105 = scalar_select %p102, %s103, %s104
    %p108 = pneg %p102
    %p109 = scmp.eq.s32.totalorder %s9, 1
    %p110 = por %p108, %p109
    %p111 = scmp.ne.s32.totalorder %s103, %s106
    %p112 = scmp.eq.s32.totalorder %s9, 0
    %p113 = por %p111, %p112
    %p114 = scmp.ne.s32.totalorder %s103, %s106
    %p115 = scmp.eq.s32.totalorder %s14, 1
    %p116 = por %p114, %p115
    %p117 = scmp.ne.s32.totalorder %s106, %s107
    %p118 = scmp.eq.s32.totalorder %s14, 0
    %p119 = por %p117, %p118
    %p120 = scmp.ne.s32.totalorder %s106, %s107
    %p121 = scmp.eq.s32.totalorder %s15, 1
    %p122 = por %p120, %p121
    %p124 = scmp.ne.s32.totalorder %s107, %s123
    %p125 = scmp.eq.s32.totalorder %s15, 0
    %p126 = por %p124, %p125
    %p127 = scmp.le.s32.totalorder 1, %s9
    %p128 = scmp.lt.s32.totalorder %s9, 3
    %p129 = pnand %p127, %p128
    %p130 = pneg %p129
    // Predicated region
    $region9: #{conv_block_forward.3} parent=5 // pred_check
      _
    $region10: #{conv_block_forward.3} parent=5 // pred_check_branch
      %132 = sbr.rel (%p129) target = $region12
    $region11: #{conv_block_forward.3} parent=5 // pred_region
      %s133 = ssub.s32 %s9, 1
      // Predicated region
      $region13: #{conv_block_forward.3} parent=11 // pred_check
        %p134 = pneg %p42
      $region14: #{conv_block_forward.3} parent=11 // pred_check_branch
        %136 = sbr.rel (%p134) target = $region16
      $region15: #{conv_block_forward.3} parent=11 // pred_region
        _
      $region16: #{conv_block_forward.3} parent=11 // pred_fallthru
        _
      // Predicated region
      $region17: #{conv_block_forward.3} parent=11 // pred_check
        %p137 = pneg %p63
      $region18: #{conv_block_forward.3} parent=11 // pred_check_branch
        %139 = sbr.rel (%p137) target = $region20
      $region19: #{conv_block_forward.3} parent=11 // pred_region
        _
      $region20: #{conv_block_forward.3} parent=11 // pred_fallthru
        _
    $region12: #{conv_block_forward.3} parent=5 // pred_fallthru
      _
    %p140 = scmp.lt.s32.totalorder %s9, 2
    // Predicated region
    $region21: #{conv_block_forward.3} parent=5 // pred_check
      %p141 = pneg %p140
    $region22: #{conv_block_forward.3} parent=5 // pred_check_branch
      %143 = sbr.rel (%p141) target = $region24
    $region23: #{conv_block_forward.3} parent=5 // pred_region
      // Predicated region
      $region25: #{conv_block_forward.3} parent=23 // pred_check
        %p144 = pneg %p85
      $region26: #{conv_block_forward.3} parent=23 // pred_check_branch
        %146 = sbr.rel (%p144) target = $region28
      $region27: #{conv_block_forward.3} parent=23 // pred_region
        %s147 = smul.u32 2, %s17
        %p148 = scmp.lt.s32.totalorder %s16, 1
        %s149 = scalar_select %p148, %s16, 1
        %p150 = scmp.lt.s32.totalorder %s147, 1
        %s151 = scalar_select %p150, %s147, 1
        %s152 = smul.addr %s149, 10
        %s153 = sadd.s32 %s151, %s152
        %s154 = smul.addr %s153, 4
        %s155 = scalar_lea.vmem %s2, %s154
        %s156 = smul.u32 2, %s17
      $region28: #{conv_block_forward.3} parent=23 // pred_fallthru
        _
    $region24: #{conv_block_forward.3} parent=5 // pred_fallthru
      _
    %p157 = scmp.le.s32.totalorder 1, %s9
    %p158 = scmp.lt.s32.totalorder %s9, 3
    %p159 = pnand %p157, %p158
    %p160 = pneg %p159
    // Predicated region
    $region29: #{conv_block_forward.3} parent=5 // pred_check
      _
    $region30: #{conv_block_forward.3} parent=5 // pred_check_branch
      %162 = sbr.rel (%p159) target = $region32
    $region31: #{conv_block_forward.3} parent=5 // pred_region
      %s163 = ssub.s32 %s9, 1
      %p164 = pneg %p42
      %p165 = pneg %p39
      %p166 = pneg %p63
      %p167 = pneg %p60
      %s168 = smul.u32 2, %s19
      %p169 = scmp.lt.s32.totalorder %s18, 1
      %s170 = scalar_select %p169, %s18, 1
      %p171 = scmp.lt.s32.totalorder %s168, 1
      %s172 = scalar_select %p171, %s168, 1
      %s173 = smul.addr %s170, 10
      %s174 = sadd.s32 %s172, %s173
      %s175 = smul.addr %s174, 4
      %s176 = scalar_lea.vmem %s2, %s175
      %p177 = pneg %p91
      %p178 = pneg %p88
      %p179 = pneg %p119
      %p180 = pneg %p116
      %s181 = smul.u32 2, %s19
      %p182 = scmp.lt.s32.totalorder %s18, 1
      %s183 = scalar_select %p182, %s18, 1
      %p184 = scmp.lt.s32.totalorder %s181, 1
      %s185 = scalar_select %p184, %s181, 1
      %s186 = smul.addr %s183, 2
      %s187 = sadd.s32 %s185, %s186
      %s188 = smul.addr %s187, 8
      %s189 = scalar_lea.vmem %s3, %s188
      %s190 = smul.u32 2, %s19
      %p191 = scmp.lt.s32.totalorder %s18, 1
      %s192 = scalar_select %p191, %s18, 1
      %p193 = scmp.lt.s32.totalorder %s190, 1
      %s194 = scalar_select %p193, %s190, 1
      %s195 = smul.addr %s192, 10
      %s196 = sadd.s32 %s194, %s195
      %s197 = smul.addr %s196, 4
      %s198 = scalar_lea.vmem %s2, %s197
      %s199 = smul.u32 2, %s19
      %s200 = smul.u32 2, %s19
      %p201 = scmp.lt.s32.totalorder %s18, 1
      %s202 = scalar_select %p201, %s18, 1
      %p203 = scmp.lt.s32.totalorder %s200, 1
      %s204 = scalar_select %p203, %s200, 1
      %s205 = smul.addr %s202, 2
      %s206 = sadd.s32 %s204, %s205
      %s207 = smul.addr %s206, 8
      %s208 = scalar_lea.vmem %s3, %s207
      %s209 = smul.u32 2, %s19
      %v211 = vld [vmem:[%s0] sm:$0xf]
      %v212 = vld [vmem:[%s198] sm:$0xff]
      %v213 = vld [vmem:[%s198 + $0x8] sm:$0xff]
      %v214 = vld [vmem:[%s198 + $0x10] sm:$0xff]
      %v215 = vld [vmem:[%s198 + $0x18] sm:$0xff]
      %v216 = vld [vmem:[%s198 + $0x20] sm:$0x33]
      %v217 = vld [vmem:[%s1] sm:$0xff]
      %219 = vset.pattern.permute.xlu0 0
      %220 = vperm.xlu0 %219, %v217
      %v221 = vpop.permute.xlu0 %220
      %v228 = vunpack.c.l.b16 %v212
      %v229 = vunpack.c.h.b16 %v212
      %v230 = vunpack.c.l.b16 %v213
      %v231 = vunpack.c.h.b16 %v213
      %v232 = vunpack.c.l.b16 %v214
      %v233 = vunpack.c.h.b16 %v214
      %v234 = vunpack.c.l.b16 %v215
      %v235 = vunpack.c.h.b16 %v215
      %v236 = vunpack.c.l.b16 %v216
      %v237 = vunpack.c.h.b16 %v216
      %v238 = vpack.c.b16 %v230, %v228
      %v239 = vpack.c.b16 %v231, %v229
      %v240 = vpack.c.b16 %v234, %v232
      %v241 = vpack.c.b16 %v235, %v233
      %v242 = vpack.c.b16 %v236, %v236
      %v243 = vpack.c.b16 %v237, %v237
      %vm248 = vcmask 293888
      %v250 = vsel %vm248, %v211, 0
      %vm252 = vcmask 1041408
      %v254 = vsel %vm252, %v242, 0
      %v257 = vsel %vm252, %v243, 0
      %259 = vmatprep.subr.bf16.mxu0 %v239
      %260 = vmatpush1.bf16.msra.mxu0 %v238
      %261 = vmatprep.subr.bf16.mxu0 %v241
      %262 = vmatpush1.bf16.msra.mxu0 %v240
      %263 = vmatprep.subr.bf16.mxu0 %v257
      %264 = vmatpush1.bf16.msra.mxu0 %v254
      %265 = vmatprep.subr.bf16.mxu0 0
      %266 = vmatpush1.bf16.msra.mxu0 0
      %267 = vmatprep.subr.bf16.mxu0 0
      %268 = vmatpush1.bf16.msra.mxu0 0
      %269 = vmatprep.subr.bf16.mxu0 0
      %270 = vmatpush1.bf16.msra.mxu0 0
      %271 = vmatprep.subr.bf16.mxu0 0
      %272 = vmatpush1.bf16.msra.mxu0 0
      %273 = vmatprep.subr.bf16.mxu0 0
      %274 = vmatpush1.bf16.msra.mxu0 0
      %275 = vmatprep.subr.bf16.mxu0 0
      %276 = vmatpush1.bf16.msra.mxu0 0
      %277 = vmatprep.subr.bf16.mxu0 0
      %278 = vmatpush1.bf16.msra.mxu0 0
      %279 = vmatprep.subr.bf16.mxu0 0
      %280 = vmatpush1.bf16.msra.mxu0 0
      %281 = vmatprep.subr.bf16.mxu0 0
      %282 = vmatpush1.bf16.msra.mxu0 0
      %283 = vmatprep.subr.bf16.mxu0 0
      %284 = vmatpush1.bf16.msra.mxu0 0
      %285 = vmatprep.subr.bf16.mxu0 0
      %286 = vmatpush1.bf16.msra.mxu0 0
      %287 = vmatprep.subr.bf16.mxu0 0
      %288 = vmatpush1.bf16.msra.mxu0 0
      %289 = vmatprep.subr.bf16.mxu0 0
      %290 = vmatpush1.bf16.msra.mxu0 0
      %291 = vmatprep.mubr.bf16.mxu0 0
      %292 = vmatmul.mubr.bf16.gmra.mrb[0].mxu0 %v250
      %v293 = vpop.f32.mrb[0].mxu0
      %v294 = vadd.f32 %v221, %v293
      %v295 = vpop.f32.mrb[0].mxu0
      %v296 = vadd.f32 %v221, %v295
      %v297 = vpop.f32.mrb[0].mxu0
      %v298 = vpop.f32.mrb[0].mxu0
      %299 = vdwg.mxu0
      %v300 = vmax.f32 %v294, 0.0
      %v301 = vmax.f32 %v296, 0.0
      %302 = vst [vmem:[%s208] sm:$0xff] %v300
      %303 = vst [vmem:[%s208 + $0x8] sm:$0xff] %v301
      %s304 = smul.u32 2, %s19
      %p305 = scmp.lt.s32.totalorder %s18, 1
      %s306 = scalar_select %p305, %s18, 1
      %p307 = scmp.lt.s32.totalorder %s304, 1
      %s308 = scalar_select %p307, %s304, 1
      %s309 = smul.addr %s306, 2
      %s310 = sadd.s32 %s308, %s309
      %s311 = smul.addr %s310, 8
      %s312 = scalar_lea.vmem %s3, %s311
      // Predicated region
      $region33: #{conv_block_forward.3} parent=31 // pred_check
        %p313 = pneg %p116
      $region34: #{conv_block_forward.3} parent=31 // pred_check_branch
        %315 = sbr.rel (%p313) target = $region36
      $region35: #{conv_block_forward.3} parent=31 // pred_region
        %s316 = smul.u32 2, %s19
      $region36: #{conv_block_forward.3} parent=31 // pred_fallthru
        _
    $region32: #{conv_block_forward.3} parent=5 // pred_fallthru
      _
    %p317 = scmp.le.s32.totalorder 2, %s9
    // Predicated region
    $region37: #{conv_block_forward.3} parent=5 // pred_check
      %p318 = pneg %p317
    $region38: #{conv_block_forward.3} parent=5 // pred_check_branch
      %320 = sbr.rel (%p318) target = $region40
    $region39: #{conv_block_forward.3} parent=5 // pred_region
      %s321 = ssub.s32 %s9, 2
      // Predicated region
      $region41: #{conv_block_forward.3} parent=39 // pred_check
        %p322 = pneg %p122
      $region42: #{conv_block_forward.3} parent=39 // pred_check_branch
        %324 = sbr.rel (%p322) target = $region44
      $region43: #{conv_block_forward.3} parent=39 // pred_region
        %s325 = smul.u32 2, %s21
        %p326 = scmp.lt.s32.totalorder %s20, 1
        %s327 = scalar_select %p326, %s20, 1
        %p328 = scmp.lt.s32.totalorder %s325, 1
        %s329 = scalar_select %p328, %s325, 1
        %s330 = smul.addr %s327, 2
        %s331 = sadd.s32 %s329, %s330
        %s332 = smul.addr %s331, 8
        %s333 = scalar_lea.vmem %s3, %s332
      $region44: #{conv_block_forward.3} parent=39 // pred_fallthru
        _
    $region40: #{conv_block_forward.3} parent=5 // pred_fallthru
      _
  $region6: #{conv_block_forward.3} parent=0 // loop_footer
    %s13 = sadd.s32 1, %s9
  $region7: #{conv_block_forward.3} parent=0 // loop_footer_branch
    %8 = sbr.rel target = $region3
  $region8: #{conv_block_forward.3} parent=0 // loop_exit
    _

</llo_original>
